<compile_context>
chip_gen: v7x
topology: tpu7x:2x2x1
jax: 0.10.0
libtpu: 0.0.40
codegen_flags: <defaults>
</compile_context>

<pallas_src>
import math
import functools

import jax
import jax.numpy as jnp
import numpy as np
from jax.experimental import pallas as pl
from jax.experimental.pallas import tpu as pltpu


def get_positional_encoding(d_model: int, max_len: int = 500) -> jnp.ndarray:
    """Buffer setup identical to the PyTorch helper (handles odd d_model too)."""
    position = np.arange(0, max_len, dtype=np.float32)[:, None]           # (max_len, 1)
    two_i = np.arange(0, d_model, 2, dtype=np.float32)                    # (ceil(d/2),)
    div_term = np.exp(two_i * -(math.log(10000.0) / d_model))             # (ceil(d/2),)
    enc = np.zeros((max_len, d_model), dtype=np.float32)
    enc[:, 0::2] = np.sin(position * div_term)
    enc[:, 1::2] = np.cos(position * div_term)[:, : d_model // 2]
    return jnp.asarray(enc)[None, :, :]                                   # (1, max_len, d_model)


def _pe_add_kernel(x_ref, pe_ref, o_ref):
    # x_ref: (TB, TC), pe_ref: (1, TC) -> sublane broadcast add.
    o_ref[...] = (x_ref[...] + pe_ref[...]).astype(o_ref.dtype)


def _pe_add_dropout_kernel(x_ref, pe_ref, bits_ref, o_ref, *, dropout_prob: float):
    y = x_ref[...] + pe_ref[...]
    # Integer threshold: keep iff bits >= p * 2^32  =>  P(keep) = 1 - p.
    thresh = jnp.uint32(min(int(round(dropout_prob * 2.0 ** 32)), 2 ** 32 - 1))
    keep = bits_ref[...] >= thresh
    scale = jnp.asarray(1.0 / (1.0 - dropout_prob), dtype=y.dtype)
    o_ref[...] = jnp.where(keep, y * scale, jnp.zeros_like(y)).astype(o_ref.dtype)


def _choose_col_tile(n_cols: int, row_tile: int, itemsize: int,
                     target_bytes: int = 2 << 20) -> int:
    """Largest 128-multiple divisor of n_cols keeping a block ~<= 2 MiB.

    Falls back to the full extent (always a legal block shape) when n_cols is
    not 128-aligned or no suitable divisor exists.
    """
    if n_cols % 128 != 0:
        return n_cols
    target_cols = max(128, target_bytes // max(itemsize * row_tile, 1))
    if n_cols <= target_cols:
        return n_cols
    best = n_cols
    d = 128
    while d <= n_cols:
        if n_cols % d == 0 and d <= target_cols:
            best = d
        d += 128
    return best


class PositionalEncoding:
    """JAX/Pallas port of the PyTorch PositionalEncoding module."""

    def __init__(self, d_model: int, dropout_prob: float, max_len: int = 500):
        self.d_model = d_model
        self.dropout_prob = float(dropout_prob)
        self.max_len = max_len
        self.positional_encodings = get_positional_encoding(d_model, max_len)

    def __call__(self, x: jnp.ndarray, *, training: bool = False,
                 rng_key: jax.Array | None = None) -> jnp.ndarray:
        B, S, D = x.shape
        assert D == self.d_model and S <= self.max_len
        cols = S * D

        # Lane-dense 2-D views (free layout plumbing — the op is elementwise).
        x2 = x.reshape(B, cols)
        pe2 = self.positional_encodings[:, :S, :].astype(x.dtype).reshape(1, cols)

        itemsize = jnp.dtype(x.dtype).itemsize
        tb = B if B <= 8 else 8
        tc = _choose_col_tile(cols, tb, itemsize)
        # Batch axis innermost: pe block index is constant across it, so the pe
        # tile is fetched once per column tile (not once per batch element).
        grid = (pl.cdiv(cols, tc), pl.cdiv(B, tb))

        x_spec = pl.BlockSpec((tb, tc), lambda c, b: (b, c))
        pe_spec = pl.BlockSpec((1, tc), lambda c, b: (0, c))
        out_spec = pl.BlockSpec((tb, tc), lambda c, b: (b, c))

        use_dropout = training and self.dropout_prob > 0.0
        bytes_accessed = (2 * B * cols + cols) * itemsize
        if use_dropout:
            bytes_accessed += 4 * B * cols  # uint32 dropout bits
        cost = pl.CostEstimate(flops=2 * B * cols, transcendentals=0,
                               bytes_accessed=bytes_accessed)
        cparams = pltpu.CompilerParams(
            dimension_semantics=("parallel", "parallel"))

        if use_dropout:
            if rng_key is None:
                rng_key = jax.random.PRNGKey(0)
            bits = jax.random.bits(rng_key, (B, cols), dtype=jnp.uint32)
            kernel = functools.partial(_pe_add_dropout_kernel,
                                       dropout_prob=self.dropout_prob)
            out2 = pl.pallas_call(
                kernel,
                out_shape=jax.ShapeDtypeStruct((B, cols), x.dtype),
                grid=grid,
                in_specs=[x_spec, pe_spec, x_spec],
                out_specs=out_spec,
                compiler_params=cparams,
                cost_estimate=cost,
            )(x2, pe2, bits)
        else:
            out2 = pl.pallas_call(
                _pe_add_kernel,
                out_shape=jax.ShapeDtypeStruct((B, cols), x.dtype),
                grid=grid,
                in_specs=[x_spec, pe_spec],
                out_specs=out_spec,
                compiler_params=cparams,
                cost_estimate=cost,
            )(x2, pe2)

        return out2.reshape(B, S, D)


if __name__ == "__main__":
    B, S, D = 2, 8, 32
    key = jax.random.PRNGKey(0)
    x = jax.random.normal(key, (B, S, D), dtype=jnp.float32)

    module = PositionalEncoding(d_model=D, dropout_prob=0.1, max_len=500)

    # Eval mode: dropout is identity — check against the pure-JAX reference.
    y_eval = jax.block_until_ready(module(x, training=False))
    y_ref = x + module.positional_encodings[:, :S, :]
    np.testing.assert_allclose(np.asarray(y_eval), np.asarray(y_ref),
                               rtol=1e-6, atol=1e-6)

    # Training mode: inverted dropout — every output is 0 or (x+pe)/(1-p).
    y_train = jax.block_until_ready(
        module(x, training=True, rng_key=jax.random.PRNGKey(42)))
    assert y_train.shape == (B, S, D)
    scaled_ref = np.asarray(y_ref) / (1.0 - module.dropout_prob)
    y_tr = np.asarray(y_train)
    ok = (np.isclose(y_tr, 0.0, atol=1e-6)
          | np.isclose(y_tr, scaled_ref, rtol=1e-5, atol=1e-6))
    assert bool(ok.all())

    print("KERNEL_OK")
</pallas_src>

<mosaic_0001>
module attributes {stable_mosaic.version = 11 : i64} {
  func.func @_pe_add_kernel(%arg0: i32, %arg1: i32, %arg2: memref<2x256xf32, #tpu.memory_space<vmem>>, %arg3: memref<1x256xf32, #tpu.memory_space<vmem>>, %arg4: memref<2x256xf32, #tpu.memory_space<vmem>>) attributes {dimension_semantics = [#tpu.dimension_semantics<parallel>, #tpu.dimension_semantics<parallel>], iteration_bounds = array<i64: 1, 1>, scalar_prefetch = 0 : i64, scratch_operands = 0 : i64, tpu.core_type = #tpu.core_type<tc>, window_params = [{transform_indices = @transform_0, window_bounds = array<i64: 2, 256>}, {transform_indices = @transform_1, window_bounds = array<i64: 1, 256>}, {transform_indices = @transform_2, window_bounds = array<i64: 2, 256>}]} {
    %c0 = arith.constant 0 : index
    %c0_0 = arith.constant 0 : index
    %0 = vector.load %arg2[%c0, %c0_0] : memref<2x256xf32, #tpu.memory_space<vmem>>, vector<2x256xf32>
    %c0_1 = arith.constant 0 : index
    %c0_2 = arith.constant 0 : index
    %1 = vector.load %arg3[%c0_1, %c0_2] : memref<1x256xf32, #tpu.memory_space<vmem>>, vector<1x256xf32>
    %2 = vector.broadcast %1 : vector<1x256xf32> to vector<2x256xf32>
    %3 = arith.addf %0, %2 : vector<2x256xf32>
    %c0_3 = arith.constant 0 : index
    %c0_4 = arith.constant 0 : index
    %4 = vector.load %arg4[%c0_3, %c0_4] : memref<2x256xf32, #tpu.memory_space<vmem>>, vector<2x256xf32>
    tpu.vector_store %arg4[%c0_3, %c0_4], %3 {strides = array<i32>} : memref<2x256xf32, #tpu.memory_space<vmem>>, vector<2x256xf32>,
    return
  }
  func.func @transform_0(%arg0: i32, %arg1: i32) -> (i32, i32) {
    %c0_i32 = arith.constant 0 : i32
    return %arg1, %arg0 : i32, i32
  }
  func.func @transform_1(%arg0: i32, %arg1: i32) -> (i32, i32) {
    %c0_i32 = arith.constant 0 : i32
    %c0_i32_0 = arith.constant 0 : i32
    return %c0_i32, %arg0 : i32, i32
  }
  func.func @transform_2(%arg0: i32, %arg1: i32) -> (i32, i32) {
    %c0_i32 = arith.constant 0 : i32
    return %arg1, %arg0 : i32, i32
  }
}

</mosaic_0001>

<llo_original>
// kernel: tpu_custom_call.1
$region0: #{tpu_custom_call.1}
  #allocation0 [shape = 'u32[]', space=smem, size = 0x4, offset = 0x4, fixed_abs, tag = 'smem constant byte address 0x4 - core index']
  #allocation1 [shape = 'u32[144,128]{1,0:T(1,128)}', space=vmem, size = 0x12000, scoped, tag = 'internal scratch']
  %s0 = inlined_call_operand.hbm [shape: f32[2,256], index: 0, kind: input, shape index: {}]
  %s1 = inlined_call_operand.vmem [shape: f32[1,256], index: 1, kind: input, shape index: {}]
  %s2 = inlined_call_operand.hbm [shape: f32[2,256], index: 2, kind: output, shape index: {}]
  %s3 = sld [smem:[#allocation0]]
  $region22: #{tpu_custom_call.1} parent=0
    _
  %s5 = ssub.s32 1, %s3
  %s6 = scalar_select 0, %s5, %s3
  $region1: #{tpu_custom_call.1} parent=0
    #allocation2 [shape = 'u8[2048]{0}', space=vmem, size = 0x800, scoped, tag = 'input window, operand 0, single buffered']
    #allocation3 [shape = 's32[1]{0}', space=sflag, size = 0x4, scoped, tag = 'scoped memory for tpu_custom_call.1']
    #allocation4 [shape = 's32[1]{0}', space=sflag, size = 0x4, scoped, tag = 'scoped memory for tpu_custom_call.1']
    #allocation5 [shape = 'u8[2048]{0}', space=vmem, size = 0x800, scoped, tag = 'output window, operand 0, single buffered']
    %7 = vsyncpa [#allocation3], 0
    %8 = vsyncpa [#allocation4], 0
    // Predicated region
    $region2: #{tpu_custom_call.1} parent=1 // pred_check
      _
    $region3: #{tpu_custom_call.1} parent=1 // pred_check_branch
      %10 = sbr.rel (0) target = $region5
    $region4: #{tpu_custom_call.1} parent=1 // pred_region
      %s12 = ssub.s32 64, 64
      %13 = vsyncadd [#allocation3], %s12
      %s15 = sshll.u32 [#allocation2], 4
      %s16 = int_to_ptr.vmem [resolvable:$true] %s15
      %18 = dma.hbm_to_vmem [thread:$0]  %s0, 64, %s16, [#allocation3]
    $region5: #{tpu_custom_call.1} parent=1 // pred_fallthru
      _
    // Predicated region
    $region6: #{tpu_custom_call.1} parent=1 // pred_check
      _
    $region7: #{tpu_custom_call.1} parent=1 // pred_check_branch
      %20 = sbr.rel (0) target = $region9
    $region8: #{tpu_custom_call.1} parent=1 // pred_region
      _
    $region9: #{tpu_custom_call.1} parent=1 // pred_fallthru
      _
    // Predicated region
    $region10: #{tpu_custom_call.1} parent=1 // pred_check
      _
    $region11: #{tpu_custom_call.1} parent=1 // pred_check_branch
      %22 = sbr.rel (0) target = $region13
    $region12: #{tpu_custom_call.1} parent=1 // pred_region
      %23 = dma.done [#allocation3], 64
    $region13: #{tpu_custom_call.1} parent=1 // pred_fallthru
      _
    %v24 = vld [vmem:[#allocation2] sm:$0xf]
    %v25 = vld [vmem:[%s1] sm:$0x3]
    %v27 = vlaneseq
    %v28 = vshrl.u32 %v27, 7
    %v29 = vsub.s32 0, %v28
    %v30 = vrot.slane %v25, %v29
    %v31 = vlaneseq
    %v32 = vshrl.u32 %v31, 7
    %v33 = vsub.s32 1, %v32
    %v34 = vrot.slane %v25, %v33
    %v35 = vcombine.low %v30, %v34
    %v37 = vunpack.c.l.s4 1983009808
    %v38 = vunpack.c.0.s8 %v37
    %v39 = vlaneseq
    %v40 = vshrl.u32 %v39, 7
    %v41 = vsub.s32 %v38, %v40
    %v42 = vrot.slane %v35, %v41
    %v44 = vadd.f32 %v24, %v42
    %45 = vst [vmem:[#allocation5] sm:$0xf] %v44
    // Predicated region
    $region14: #{tpu_custom_call.1} parent=1 // pred_check
      _
    $region15: #{tpu_custom_call.1} parent=1 // pred_check_branch
      %47 = sbr.rel (0) target = $region17
    $region16: #{tpu_custom_call.1} parent=1 // pred_region
      %s49 = ssub.s32 64, 64
      %50 = vsyncadd [#allocation4], %s49
      %s52 = sshll.u32 [#allocation5], 4
      %s53 = int_to_ptr.vmem [resolvable:$true] %s52
      %55 = dma.vmem_to_hbm [thread:$0]  %s53, 64, %s2, [#allocation4]
    $region17: #{tpu_custom_call.1} parent=1 // pred_fallthru
      _
    // Predicated region
    $region18: #{tpu_custom_call.1} parent=1 // pred_check
      _
    $region19: #{tpu_custom_call.1} parent=1 // pred_check_branch
      %57 = sbr.rel (0) target = $region21
    $region20: #{tpu_custom_call.1} parent=1 // pred_region
      %58 = dma.done [#allocation4], 64
    $region21: #{tpu_custom_call.1} parent=1 // pred_fallthru
      _
    %59 = vsyncpa [#allocation3], 1
    %60 = vsyncpa [#allocation4], 1

</llo_original>
